<compile_context>
chip_gen: v7x
topology: tpu7x:2x2x1
jax: 0.10.0
libtpu: 0.0.40
codegen_flags: <defaults>
</compile_context>

<pallas_src>
import functools

import jax
import jax.numpy as jnp
from jax.experimental import pallas as pl
from jax.experimental.pallas import tpu as pltpu


def _round_up(v, m):
    return (v + m - 1) // m * m


def _vmem_capacity_bytes():
    try:
        return int(pltpu.get_tpu_info().vmem_capacity_bytes)
    except Exception:
        return 64 << 20  # conservative fallback (v7x per-TensorCore size)


def _is_v7x():
    try:
        return "v7" in jax.devices()[0].device_kind.lower()
    except Exception:
        return False


# ---------------------------------------------------------------------------
# Kernels
# ---------------------------------------------------------------------------
def _linear_relu_fused_kernel(x_ref, wt_ref, b_ref, o_ref, *, cast_bf16):
    # Whole-K-resident single pass: no accumulator scratch, no pl.when gating.
    x = x_ref[...]
    w = wt_ref[...]
    if cast_bf16:
        x = x.astype(jnp.bfloat16)
        w = w.astype(jnp.bfloat16)
    acc = jnp.dot(x, w, preferred_element_type=jnp.float32)
    o_ref[...] = jnp.maximum(acc + b_ref[...], 0.0).astype(o_ref.dtype)


def _linear_relu_acc_kernel(x_ref, wt_ref, b_ref, o_ref, acc_ref, *, cast_bf16):
    # K-tiled path with f32 VMEM accumulator (reduction axis innermost).
    k = pl.program_id(2)

    @pl.when(k == 0)
    def _():
        acc_ref[...] = jnp.zeros_like(acc_ref)

    x = x_ref[...]
    w = wt_ref[...]
    if cast_bf16:
        x = x.astype(jnp.bfloat16)
        w = w.astype(jnp.bfloat16)
    acc_ref[...] += jnp.dot(x, w, preferred_element_type=jnp.float32)

    @pl.when(k == pl.num_programs(2) - 1)
    def _():
        o_ref[...] = jnp.maximum(acc_ref[...] + b_ref[...], 0.0).astype(o_ref.dtype)


# ---------------------------------------------------------------------------
# Planning helpers (pure functions of shapes + VMEM budget)
# ---------------------------------------------------------------------------
def _plan_nk(in_features, out_features, vmem_budget, tm_assume=512):
    """Pick (K_pad, N_pad, tk, tn) independent of the batch dim."""
    k0 = _round_up(in_features, 128)
    n0 = _round_up(out_features, 128)

    # N tile: largest of the candidates with <=12.5% padding waste.
    if n0 <= 512:
        tn = n0
    else:
        tn = 128
        for t in (512, 384, 256, 128):
            if (_round_up(n0, t) - n0) / n0 <= 0.125:
                tn = t
                break
    n_pad = _round_up(n0, tn)

    def strip_bytes(t_k, with_acc):
        b = 4 * (2 * tm_assume * t_k + 2 * t_k * tn + 2 * tn + 2 * tm_assume * tn)
        if with_acc:
            b += 4 * tm_assume * tn
        return b

    # Prefer whole-K residency (fused single pass, no accumulator RMW).
    if strip_bytes(k0, with_acc=False) <= vmem_budget:
        tk = k0
    else:
        tk = 128
        for t in (2048, 1024, 512, 256, 128):
            if t <= k0 and (_round_up(k0, t) - k0) / k0 <= 0.125 \
                    and strip_bytes(t, with_acc=True) <= vmem_budget:
                tk = t
                break
    k_pad = _round_up(k0, tk)
    return k_pad, n_pad, tk, tn


def _plan_m(m, tk, tn, vmem_budget, fused):
    """Pick (M_pad, tm): padding-aware and VMEM-fitting."""
    m_pad = _round_up(m, 8)

    max_tm = 512
    while max_tm > 8:
        b = 4 * (2 * max_tm * tk + 2 * tk * tn + 2 * tn + 2 * max_tm * tn)
        if not fused:
            b += 4 * max_tm * tn
        if b <= vmem_budget:
            break
        max_tm //= 2

    if m_pad <= max_tm:
        tm = m_pad
    else:
        tm = 8
        for t in (512, 384, 256, 128, 64, 32, 16, 8):
            if t <= max_tm and (_round_up(m_pad, t) - m_pad) / m_pad <= 0.125:
                tm = t
                break
    return _round_up(m_pad, tm), tm


def _prepare_params(weight, bias, k_pad, n_pad):
    """One-time: transpose to (IN, OUT) and zero-pad to (K_pad, N_pad)."""
    out_f, in_f = weight.shape
    wt = weight.T
    if (k_pad, n_pad) != (in_f, out_f):
        wt = jnp.pad(wt, ((0, k_pad - in_f), (0, n_pad - out_f)))
    bp = bias if n_pad == out_f else jnp.pad(bias, (0, n_pad - out_f))
    return wt, bp.reshape(1, n_pad)


# ---------------------------------------------------------------------------
# pallas_call wrapper
# ---------------------------------------------------------------------------
def _linear_relu_call(xp, wt, bp, *, tm, tn, tk, m_pad, n_pad, k_pad,
                      out_dtype, use_bf16, vmem_limit):
    gm, gn = m_pad // tm, n_pad // tn
    fused = (tk == k_pad)
    gk = 1 if fused else k_pad // tk

    # HBM traffic including re-reads: x swept once per N tile, w once per M tile.
    cost = pl.CostEstimate(
        flops=2 * m_pad * k_pad * n_pad,
        transcendentals=0,
        bytes_accessed=4 * (m_pad * k_pad * gn + k_pad * n_pad * gm
                            + m_pad * n_pad + n_pad * gm),
    )

    if fused:
        kernel = functools.partial(_linear_relu_fused_kernel, cast_bf16=use_bf16)
        grid_spec = pltpu.PrefetchScalarGridSpec(
            num_scalar_prefetch=0,
            grid=(gm, gn),
            in_specs=[
                pl.BlockSpec((tm, k_pad), lambda i, j: (i, 0)),   # x strip
                pl.BlockSpec((k_pad, tn), lambda i, j: (0, j)),   # W^T strip
                pl.BlockSpec((1, tn), lambda i, j: (0, j)),       # bias tile
            ],
            out_specs=pl.BlockSpec((tm, tn), lambda i, j: (i, j)),
        )
        dims = ("parallel", "parallel")
    else:
        kernel = functools.partial(_linear_relu_acc_kernel, cast_bf16=use_bf16)
        grid_spec = pltpu.PrefetchScalarGridSpec(
            num_scalar_prefetch=0,
            grid=(gm, gn, gk),
            in_specs=[
                pl.BlockSpec((tm, tk), lambda i, j, k: (i, k)),   # x tile
                pl.BlockSpec((tk, tn), lambda i, j, k: (k, j)),   # W^T tile
                pl.BlockSpec((1, tn), lambda i, j, k: (0, j)),    # bias tile
            ],
            out_specs=pl.BlockSpec((tm, tn), lambda i, j, k: (i, j)),
            scratch_shapes=[pltpu.VMEM((tm, tn), jnp.float32)],
        )
        dims = ("parallel", "parallel", "arbitrary")

    return pl.pallas_call(
        kernel,
        out_shape=jax.ShapeDtypeStruct((m_pad, n_pad), out_dtype),
        grid_spec=grid_spec,
        compiler_params=pltpu.CompilerParams(
            dimension_semantics=dims,
            vmem_limit_bytes=vmem_limit,
        ),
        cost_estimate=cost,
    )(xp, wt, bp)


def make_linear_block(weight, bias, *, use_bf16_mxu=False):
    """Returns apply(x): Pallas equivalent of LinearBlock.forward.

    weight: (OUT, IN) float32 (PyTorch nn.Linear layout)
    bias:   (OUT,)    float32
    Weight/bias are padded & transposed ONCE here, not per call.
    """
    out_f, in_f = weight.shape
    cap = _vmem_capacity_bytes()
    budget = (cap * 3) // 4  # leave headroom for compiler scratch / semaphores

    k_pad, n_pad, tk, tn0 = _plan_nk(in_f, out_f, budget)
    wt, bp = _prepare_params(weight, bias, k_pad, n_pad)
    fused = (tk == k_pad)

    def apply(x):
        orig_shape = x.shape
        assert orig_shape[-1] == in_f, "in_features mismatch"
        x2 = x.reshape(-1, in_f)
        m = x2.shape[0]

        m_pad, tm = _plan_m(m, tk, tn0, budget, fused)
        tn = tn0

        # v7x has 2 TensorCores: avoid a (1,1) parallel grid when splittable.
        if _is_v7x() and (m_pad // tm) * (n_pad // tn) == 1:
            if tn % 256 == 0:
                tn //= 2
            elif tm % 16 == 0:
                tm //= 2

        xp = x2
        if m_pad != m or k_pad != in_f:
            xp = jnp.pad(x2, ((0, m_pad - m), (0, k_pad - in_f)))

        est = 4 * (2 * tm * tk + 2 * tk * tn + 2 * tn + 2 * tm * tn)
        if not fused:
            est += 4 * tm * tn
        vmem_limit = int(min(max(est + (2 << 20), 16 << 20), budget))

        out = _linear_relu_call(
            xp, wt, bp, tm=tm, tn=tn, tk=tk, m_pad=m_pad, n_pad=n_pad,
            k_pad=k_pad, out_dtype=x.dtype, use_bf16=use_bf16_mxu,
            vmem_limit=vmem_limit)

        out = out[:m, :out_f]
        return out.reshape(*orig_shape[:-1], out_f)

    return apply


def linear_block(x, weight, bias, *, use_bf16_mxu=False):
    """One-shot convenience wrapper (prefer make_linear_block to cache W^T)."""
    return make_linear_block(weight, bias, use_bf16_mxu=use_bf16_mxu)(x)


if __name__ == "__main__":
    # Small shapes consistent with the module: batch=8, in_features=32, out_features=64.
    B, IN, OUT = 8, 32, 64

    key = jax.random.PRNGKey(0)
    kx, kw, kb = jax.random.split(key, 3)

    x = jax.random.normal(kx, (B, IN), dtype=jnp.float32)
    # PyTorch-like uniform(-1/sqrt(in), 1/sqrt(in)) init.
    bound = 1.0 / jnp.sqrt(jnp.float32(IN))
    weight = jax.random.uniform(kw, (OUT, IN), dtype=jnp.float32,
                                minval=-bound, maxval=bound)
    bias = jax.random.uniform(kb, (OUT,), dtype=jnp.float32,
                              minval=-bound, maxval=bound)

    block = make_linear_block(weight, bias)  # weight padded/transposed once
    out = block(x)
    jax.block_until_ready(out)

    # Correctness vs plain-JAX reference (Linear -> ReLU -> Dropout(p=0)).
    ref = jnp.maximum(x @ weight.T + bias, 0.0)
    assert out.shape == (B, OUT)
    assert jnp.allclose(out, ref, atol=1e-5, rtol=1e-5)

    print("KERNEL_OK")
</pallas_src>

<mosaic_0001>
module attributes {stable_mosaic.version = 11 : i64} {
  func.func @_linear_relu_fused_kernel(%arg0: i32, %arg1: i32, %arg2: memref<8x128xf32, #tpu.memory_space<vmem>>, %arg3: memref<128x128xf32, #tpu.memory_space<vmem>>, %arg4: memref<1x128xf32, #tpu.memory_space<vmem>>, %arg5: memref<8x128xf32, #tpu.memory_space<vmem>>) attributes {dimension_semantics = [#tpu.dimension_semantics<parallel>, #tpu.dimension_semantics<parallel>], iteration_bounds = array<i64: 1, 1>, scalar_prefetch = 0 : i64, scratch_operands = 0 : i64, tpu.core_type = #tpu.core_type<tc>, window_params = [{transform_indices = @transform_0, window_bounds = array<i64: 8, 128>}, {transform_indices = @transform_1, window_bounds = array<i64: 128, 128>}, {transform_indices = @transform_2, window_bounds = array<i64: 1, 128>}, {transform_indices = @transform_3, window_bounds = array<i64: 8, 128>}]} {
    %c0 = arith.constant 0 : index
    %c0_0 = arith.constant 0 : index
    %0 = vector.load %arg2[%c0, %c0_0] : memref<8x128xf32, #tpu.memory_space<vmem>>, vector<8x128xf32>
    %c0_1 = arith.constant 0 : index
    %c0_2 = arith.constant 0 : index
    %1 = vector.load %arg3[%c0_1, %c0_2] : memref<128x128xf32, #tpu.memory_space<vmem>>, vector<128x128xf32>
    %cst = arith.constant dense<0.000000e+00> : vector<8x128xf32>
    %2 = tpu.matmul %0, %1, %cst {dimension_numbers = #tpu.dot_dimension_numbers<[1], [0], [0], [1], [0, 0, 1, 1], [], []>} : vector<8x128xf32>, vector<128x128xf32>, vector<8x128xf32> -> vector<8x128xf32>
    %c0_3 = arith.constant 0 : index
    %c0_4 = arith.constant 0 : index
    %3 = vector.load %arg4[%c0_3, %c0_4] : memref<1x128xf32, #tpu.memory_space<vmem>>, vector<1x128xf32>
    %4 = vector.broadcast %3 : vector<1x128xf32> to vector<8x128xf32>
    %5 = arith.addf %2, %4 : vector<8x128xf32>
    %cst_5 = arith.constant 0.000000e+00 : f32
    %6 = vector.broadcast %cst_5 : f32 to vector<8x128xf32>
    %7 = arith.maximumf %5, %6 : vector<8x128xf32>
    %c0_6 = arith.constant 0 : index
    %c0_7 = arith.constant 0 : index
    %8 = vector.load %arg5[%c0_6, %c0_7] : memref<8x128xf32, #tpu.memory_space<vmem>>, vector<8x128xf32>
    tpu.vector_store %arg5[%c0_6, %c0_7], %7 {strides = array<i32>} : memref<8x128xf32, #tpu.memory_space<vmem>>, vector<8x128xf32>,
    return
  }
  func.func @transform_0(%arg0: i32, %arg1: i32) -> (i32, i32) {
    %c0_i32 = arith.constant 0 : i32
    %c0_i32_0 = arith.constant 0 : i32
    return %arg0, %c0_i32 : i32, i32
  }
  func.func @transform_1(%arg0: i32, %arg1: i32) -> (i32, i32) {
    %c0_i32 = arith.constant 0 : i32
    %c0_i32_0 = arith.constant 0 : i32
    return %c0_i32, %arg1 : i32, i32
  }
  func.func @transform_2(%arg0: i32, %arg1: i32) -> (i32, i32) {
    %c0_i32 = arith.constant 0 : i32
    %c0_i32_0 = arith.constant 0 : i32
    return %c0_i32, %arg1 : i32, i32
  }
  func.func @transform_3(%arg0: i32, %arg1: i32) -> (i32, i32) {
    %c0_i32 = arith.constant 0 : i32
    return %arg0, %arg1 : i32, i32
  }
}

</mosaic_0001>

<llo_original>
// kernel: tpu_custom_call.1
$region0: #{tpu_custom_call.1}
  #allocation0 [shape = 'u32[]', space=smem, size = 0x4, offset = 0x4, fixed_abs, tag = 'smem constant byte address 0x4 - core index']
  #allocation1 [shape = 'u32[144,128]{1,0:T(1,128)}', space=vmem, size = 0x12000, scoped, tag = 'internal scratch']
  %s0 = inlined_call_operand.hbm [shape: f32[8,128], index: 0, kind: input, shape index: {}]
  %s1 = inlined_call_operand.hbm [shape: f32[128,128], index: 1, kind: input, shape index: {}]
  %s2 = inlined_call_operand.vmem [shape: f32[1,128], index: 2, kind: input, shape index: {}]
  %s3 = inlined_call_operand.hbm [shape: f32[8,128], index: 3, kind: output, shape index: {}]
  %s4 = sld [smem:[#allocation0]]
  $region30: #{tpu_custom_call.1} parent=0
    _
  %s6 = ssub.s32 1, %s4
  %s7 = scalar_select 0, %s6, %s4
  $region1: #{tpu_custom_call.1} parent=0
    #allocation2 [shape = 'u8[4096]{0}', space=vmem, size = 0x1000, scoped, tag = 'input window, operand 0, single buffered']
    #allocation3 [shape = 's32[1]{0}', space=sflag, size = 0x4, scoped, tag = 'scoped memory for tpu_custom_call.1']
    #allocation4 [shape = 's32[1]{0}', space=sflag, size = 0x4, scoped, tag = 'scoped memory for tpu_custom_call.1']
    #allocation5 [shape = 'u8[65536]{0}', space=vmem, size = 0x10000, scoped, tag = 'input window, operand 1, single buffered']
    #allocation6 [shape = 's32[1]{0}', space=sflag, size = 0x4, scoped, tag = 'scoped memory for tpu_custom_call.1']
    #allocation7 [shape = 'u8[4096]{0}', space=vmem, size = 0x1000, scoped, tag = 'output window, operand 0, single buffered']
    %8 = vsyncpa [#allocation3], 0
    %9 = vsyncpa [#allocation6], 0
    %10 = vsyncpa [#allocation4], 0
    // Predicated region
    $region2: #{tpu_custom_call.1} parent=1 // pred_check
      _
    $region3: #{tpu_custom_call.1} parent=1 // pred_check_branch
      %12 = sbr.rel (0) target = $region5
    $region4: #{tpu_custom_call.1} parent=1 // pred_region
      %s14 = ssub.s32 128, 128
      %15 = vsyncadd [#allocation3], %s14
      %s17 = sshll.u32 [#allocation2], 4
      %s18 = int_to_ptr.vmem [resolvable:$true] %s17
      %20 = dma.hbm_to_vmem [thread:$0]  %s0, 128, %s18, [#allocation3]
    $region5: #{tpu_custom_call.1} parent=1 // pred_fallthru
      _
    // Predicated region
    $region6: #{tpu_custom_call.1} parent=1 // pred_check
      _
    $region7: #{tpu_custom_call.1} parent=1 // pred_check_branch
      %22 = sbr.rel (0) target = $region9
    $region8: #{tpu_custom_call.1} parent=1 // pred_region
      %s24 = ssub.s32 2048, 2048
      %25 = vsyncadd [#allocation6], %s24
      %s26 = sshll.u32 [#allocation5], 4
      %s27 = int_to_ptr.vmem [resolvable:$true] %s26
      %32 = dma.hbm_to_vmem [thread:$0]  %s1, 2048, %s27, [#allocation6], 128, 128, 8
    $region9: #{tpu_custom_call.1} parent=1 // pred_fallthru
      _
    // Predicated region
    $region10: #{tpu_custom_call.1} parent=1 // pred_check
      _
    $region11: #{tpu_custom_call.1} parent=1 // pred_check_branch
      %34 = sbr.rel (0) target = $region13
    $region12: #{tpu_custom_call.1} parent=1 // pred_region
      _
    $region13: #{tpu_custom_call.1} parent=1 // pred_fallthru
      _
    // Predicated region
    $region14: #{tpu_custom_call.1} parent=1 // pred_check
      _
    $region15: #{tpu_custom_call.1} parent=1 // pred_check_branch
      %36 = sbr.rel (0) target = $region17
    $region16: #{tpu_custom_call.1} parent=1 // pred_region
      %37 = dma.done [#allocation3], 128
    $region17: #{tpu_custom_call.1} parent=1 // pred_fallthru
      _
    // Predicated region
    $region18: #{tpu_custom_call.1} parent=1 // pred_check
      _
    $region19: #{tpu_custom_call.1} parent=1 // pred_check_branch
      %39 = sbr.rel (0) target = $region21
    $region20: #{tpu_custom_call.1} parent=1 // pred_region
      %40 = dma.done [#allocation6], 2048
    $region21: #{tpu_custom_call.1} parent=1 // pred_fallthru
      _
    %v41 = vld [vmem:[#allocation2] sm:$0xff]
    %v42 = vld [vmem:[#allocation5] sm:$0xff]
    %v43 = vld [vmem:[#allocation5 + $0x8] sm:$0xff]
    %v44 = vld [vmem:[#allocation5 + $0x10] sm:$0xff]
    %v45 = vld [vmem:[#allocation5 + $0x18] sm:$0xff]
    %v46 = vld [vmem:[#allocation5 + $0x20] sm:$0xff]
    %v47 = vld [vmem:[#allocation5 + $0x28] sm:$0xff]
    %v48 = vld [vmem:[#allocation5 + $0x30] sm:$0xff]
    %v49 = vld [vmem:[#allocation5 + $0x38] sm:$0xff]
    %v50 = vld [vmem:[#allocation5 + $0x40] sm:$0xff]
    %v51 = vld [vmem:[#allocation5 + $0x48] sm:$0xff]
    %v52 = vld [vmem:[#allocation5 + $0x50] sm:$0xff]
    %v53 = vld [vmem:[#allocation5 + $0x58] sm:$0xff]
    %v54 = vld [vmem:[#allocation5 + $0x60] sm:$0xff]
    %v55 = vld [vmem:[#allocation5 + $0x68] sm:$0xff]
    %v56 = vld [vmem:[#allocation5 + $0x70] sm:$0xff]
    %v57 = vld [vmem:[#allocation5 + $0x78] sm:$0xff]
    %v58 = vld [vmem:[%s2] sm:$0x1]
    %v60 = vlaneseq
    %v61 = vshrl.u32 %v60, 7
    %v62 = vsub.s32 0, %v61
    %v63 = vrot.slane %v58, %v62
    %65 = vmatprep.subr.mxu0 0.0
    %66 = vmatpush1.msra.mxu0 %v42
    %67 = vmatprep.subr.mxu0 0.0
    %68 = vmatpush1.msra.mxu0 %v43
    %69 = vmatprep.subr.mxu0 0.0
    %70 = vmatpush1.msra.mxu0 %v44
    %71 = vmatprep.subr.mxu0 0.0
    %72 = vmatpush1.msra.mxu0 %v45
    %73 = vmatprep.subr.mxu0 0.0
    %74 = vmatpush1.msra.mxu0 %v46
    %75 = vmatprep.subr.mxu0 0.0
    %76 = vmatpush1.msra.mxu0 %v47
    %77 = vmatprep.subr.mxu0 0.0
    %78 = vmatpush1.msra.mxu0 %v48
    %79 = vmatprep.subr.mxu0 0.0
    %80 = vmatpush1.msra.mxu0 %v49
    %81 = vmatprep.subr.mxu0 0.0
    %82 = vmatpush1.msra.mxu0 %v50
    %83 = vmatprep.subr.mxu0 0.0
    %84 = vmatpush1.msra.mxu0 %v51
    %85 = vmatprep.subr.mxu0 0.0
    %86 = vmatpush1.msra.mxu0 %v52
    %87 = vmatprep.subr.mxu0 0.0
    %88 = vmatpush1.msra.mxu0 %v53
    %89 = vmatprep.subr.mxu0 0.0
    %90 = vmatpush1.msra.mxu0 %v54
    %91 = vmatprep.subr.mxu0 0.0
    %92 = vmatpush1.msra.mxu0 %v55
    %93 = vmatprep.subr.mxu0 0.0
    %94 = vmatpush1.msra.mxu0 %v56
    %95 = vmatprep.subr.mxu0 0.0
    %96 = vmatpush1.msra.mxu0 %v57
    %97 = vmatprep.subr.mxu0 0.0
    %98 = vmatpush1.msra.mxu0 0.0
    %99 = vmatprep.subr.mxu0 0.0
    %100 = vmatpush1.msra.mxu0 0.0
    %101 = vmatprep.subr.mxu0 0.0
    %102 = vmatpush1.msra.mxu0 0.0
    %103 = vmatprep.subr.mxu0 0.0
    %104 = vmatpush1.msra.mxu0 0.0
    %105 = vmatprep.subr.mxu0 0.0
    %106 = vmatpush1.msra.mxu0 0.0
    %107 = vmatprep.subr.mxu0 0.0
    %108 = vmatpush1.msra.mxu0 0.0
    %109 = vmatprep.subr.mxu0 0.0
    %110 = vmatpush1.msra.mxu0 0.0
    %111 = vmatprep.subr.mxu0 0.0
    %112 = vmatpush1.msra.mxu0 0.0
    %113 = vmatprep.subr.mxu0 0.0
    %114 = vmatpush1.msra.mxu0 0.0
    %115 = vmatprep.subr.mxu0 0.0
    %116 = vmatpush1.msra.mxu0 0.0
    %117 = vmatprep.subr.mxu0 0.0
    %118 = vmatpush1.msra.mxu0 0.0
    %119 = vmatprep.subr.mxu0 0.0
    %120 = vmatpush1.msra.mxu0 0.0
    %121 = vmatprep.subr.mxu0 0.0
    %122 = vmatpush1.msra.mxu0 0.0
    %123 = vmatprep.subr.mxu0 0.0
    %124 = vmatpush1.msra.mxu0 0.0
    %125 = vmatprep.subr.mxu0 0.0
    %126 = vmatpush1.msra.mxu0 0.0
    %127 = vmatprep.subr.mxu0 0.0
    %128 = vmatpush1.msra.mxu0 0.0
    %129 = vmatprep.mubr.f32.mxu0 0.0
    %130 = vmatmul.mubr.f32.gmra.mrb[0].mxu0 %v41
    %v131 = vpop.f32.mrb[0].mxu0
    %v132 = vadd.f32 %v63, %v131
    %v133 = vpop.f32.mrb[0].mxu0
    %134 = vdwg.mxu0
    %v135 = vmax.f32 %v132, 0.0
    %136 = vst [vmem:[#allocation7] sm:$0xff] %v135
    // Predicated region
    $region22: #{tpu_custom_call.1} parent=1 // pred_check
      _
    $region23: #{tpu_custom_call.1} parent=1 // pred_check_branch
      %138 = sbr.rel (0) target = $region25
    $region24: #{tpu_custom_call.1} parent=1 // pred_region
      %s140 = ssub.s32 128, 128
      %141 = vsyncadd [#allocation4], %s140
      %s143 = sshll.u32 [#allocation7], 4
      %s144 = int_to_ptr.vmem [resolvable:$true] %s143
      %146 = dma.vmem_to_hbm [thread:$0]  %s144, 128, %s3, [#allocation4]
    $region25: #{tpu_custom_call.1} parent=1 // pred_fallthru
      _
    // Predicated region
    $region26: #{tpu_custom_call.1} parent=1 // pred_check
      _
    $region27: #{tpu_custom_call.1} parent=1 // pred_check_branch
      %148 = sbr.rel (0) target = $region29
    $region28: #{tpu_custom_call.1} parent=1 // pred_region
      %149 = dma.done [#allocation4], 128
    $region29: #{tpu_custom_call.1} parent=1 // pred_fallthru
      _
    %150 = vsyncpa [#allocation3], 1
    %151 = vsyncpa [#allocation6], 1
    %152 = vsyncpa [#allocation4], 1

</llo_original>
